<compile_context>
chip_gen: v5e
topology: v5e:2x2
jax: 0.10.0
libtpu: 0.0.40
codegen_flags: <defaults>
</compile_context>

<pallas_src>
import jax
import jax.numpy as jnp
from jax.experimental import pallas as pl
from jax.experimental.pallas import tpu as pltpu


def _copy_kernel(src_ref, out_ref):
    # The src window already addresses the rows selected by the index_map.
    out_ref[...] = src_ref[...]


# Per-block byte target.  BlockSpec double-buffers input and output, so the
# per-call VMEM footprint is ~4x this; 6 MiB -> ~24 MiB, comfortably under the
# 32 MiB scoped-VMEM default (v7x has only 64 MiB physical per TC).
_BLOCK_BYTES_TARGET = 6 * 1024 * 1024


def positional_embedding_lookup(emb_table, seq_len, *, block_bytes=_BLOCK_BYTES_TARGET):
    """Returns emb_table[arange(seq_len)] == emb_table[:seq_len] via a Pallas copy."""
    max_seq_len, dim = emb_table.shape
    seq_len = int(seq_len)
    assert 0 < seq_len <= max_seq_len
    dtype = emb_table.dtype
    itemsize = jnp.dtype(dtype).itemsize

    # Native sublane granularity: 8 rows (4-byte), 16 (2-byte), 32 (1-byte).
    sub = max(8, 32 // itemsize)

    # Rows per block: as many sublane multiples as fit the byte budget, but no
    # more than seq_len rounded up to a sublane multiple (single-step case).
    bytes_per_row = dim * itemsize
    rows_target = max(sub, block_bytes // max(bytes_per_row, 1))
    block_rows = max(sub, (rows_target // sub) * sub)
    block_rows = min(block_rows, pl.cdiv(seq_len, sub) * sub)

    grid = (pl.cdiv(seq_len, block_rows),)

    return pl.pallas_call(
        _copy_kernel,
        out_shape=jax.ShapeDtypeStruct((seq_len, dim), dtype),
        grid=grid,
        # (block_rows, dim): block_rows is a multiple of 8 and the last dim is
        # the full array extent, so the (8,128) BlockSpec constraint holds for
        # any dim; when dim % 128 == 0 the stores are additionally unmasked.
        in_specs=[pl.BlockSpec((block_rows, dim), lambda i: (i, 0))],
        out_specs=pl.BlockSpec((block_rows, dim), lambda i: (i, 0)),
        compiler_params=pltpu.CompilerParams(
            dimension_semantics=("parallel",)),
        cost_estimate=pl.CostEstimate(
            flops=0, transcendentals=0,
            bytes_accessed=2 * seq_len * dim * itemsize),
    )(emb_table)
    # TODO(synk): a single HBM->HBM pltpu.make_async_copy (memory_space=pl.ANY)
    # would skip VMEM staging entirely; the BlockSpec pipeline above is kept as
    # the most well-trodden lowering path for a streaming copy.


def absolute_positional_embedding(emb_table, x):
    """Mirror of the PyTorch module forward: only x.shape[1] is used."""
    return positional_embedding_lookup(emb_table, x.shape[1])


def _run_case(name, dtype, max_seq_len, dim, seq_len, key, **kwargs):
    emb_table = jax.random.normal(
        key, (max_seq_len, dim), dtype=jnp.float32).astype(dtype)
    out = jax.block_until_ready(
        positional_embedding_lookup(emb_table, seq_len, **kwargs))
    ref = emb_table[:seq_len]  # == emb_table[arange(seq_len)]
    assert out.shape == (seq_len, dim), name
    assert out.dtype == emb_table.dtype, name
    assert jnp.array_equal(out, ref), f"kernel output mismatch in case {name}"


if __name__ == "__main__":
    key = jax.random.PRNGKey(0)
    k_emb, k_x, k1, k2, k3, k4 = jax.random.split(key, 6)

    # Primary case mirroring the module forward: x only supplies seq_len.
    dim, max_seq_len = 32, 64
    emb_table = jax.random.normal(k_emb, (max_seq_len, dim), dtype=jnp.float32)
    x = jax.random.normal(k_x, (2, 8, dim), dtype=jnp.float32)
    out = jax.block_until_ready(absolute_positional_embedding(emb_table, x))
    assert out.shape == (x.shape[1], dim)
    assert jnp.array_equal(out, emb_table[: x.shape[1]])

    # Extra small cases exercising tiling / remainder / dtype behavior.
    _run_case("f32_narrow", jnp.float32, 64, 32, 8, k1)                  # dim < 128 (masked vst, no reshapes)
    _run_case("f32_lane_dense", jnp.float32, 128, 128, 32, k2)           # dim % 128 == 0 (unmasked vst)
    _run_case("bf16_partial", jnp.bfloat16, 256, 128, 24, k3)            # packed dtype, seq not sublane-multiple
    _run_case("f32_multiblock", jnp.float32, 128, 128, 64, k4,
              block_bytes=8 * 128 * 4)                                   # grid > 1 pipeline
    _run_case("f32_odd_seq", jnp.float32, 64, 32, 5, k1)                 # odd seq_len, single padded block
    _run_case("f32_cdiv_remainder", jnp.float32, 128, 128, 20, k2,
              block_bytes=8 * 128 * 4)                                   # partial last block in cdiv grid

    print("KERNEL_OK")
</pallas_src>

<mosaic_0001>
module attributes {stable_mosaic.version = 11 : i64} {
  func.func @_copy_kernel(%arg0: i32, %arg1: memref<8x32xf32, #tpu.memory_space<vmem>>, %arg2: memref<8x32xf32, #tpu.memory_space<vmem>>) attributes {dimension_semantics = [#tpu.dimension_semantics<parallel>], iteration_bounds = array<i64: 1>, scalar_prefetch = 0 : i64, scratch_operands = 0 : i64, tpu.core_type = #tpu.core_type<tc>, window_params = [{transform_indices = @transform_0, window_bounds = array<i64: 8, 32>}, {transform_indices = @transform_1, window_bounds = array<i64: 8, 32>}]} {
    %c0 = arith.constant 0 : index
    %c0_0 = arith.constant 0 : index
    %0 = vector.load %arg1[%c0, %c0_0] : memref<8x32xf32, #tpu.memory_space<vmem>>, vector<8x32xf32>
    %c0_1 = arith.constant 0 : index
    %c0_2 = arith.constant 0 : index
    %1 = vector.load %arg2[%c0_1, %c0_2] : memref<8x32xf32, #tpu.memory_space<vmem>>, vector<8x32xf32>
    tpu.vector_store %arg2[%c0_1, %c0_2], %0 {strides = array<i32>} : memref<8x32xf32, #tpu.memory_space<vmem>>, vector<8x32xf32>,
    return
  }
  func.func @transform_0(%arg0: i32) -> (i32, i32) {
    %c0_i32 = arith.constant 0 : i32
    %c0_i32_0 = arith.constant 0 : i32
    return %arg0, %c0_i32 : i32, i32
  }
  func.func @transform_1(%arg0: i32) -> (i32, i32) {
    %c0_i32 = arith.constant 0 : i32
    %c0_i32_0 = arith.constant 0 : i32
    return %arg0, %c0_i32 : i32, i32
  }
}

</mosaic_0001>

<llo_original>
// kernel: tpu_custom_call.1
$region0: #{tpu_custom_call.1}
  #allocation0 [shape = 'u32[]', space=smem, size = 0x4, offset = 0x4, fixed_abs, tag = 'smem constant byte address 0x4 - core index']
  #allocation1 [shape = 'u32[72,128]{1,0:T(1,128)}', space=vmem, size = 0x9000, scoped, tag = 'internal scratch']
  %s0 = inlined_call_operand.vmem [shape: f32[64,32], index: 0, kind: input, shape index: {}]
  %s1 = inlined_call_operand.hbm [shape: f32[8,32], index: 1, kind: output, shape index: {}]
  %s2 = sld [smem:[#allocation0]]
  $region14: #{tpu_custom_call.1} parent=0
    _
  %s4 = ssub.s32 1, %s2
  %s5 = scalar_select 0, %s4, %s2
  $region1: #{tpu_custom_call.1} parent=0
    #allocation2 [shape = 'u8[4096]{0}', space=vmem, size = 0x1000, scoped, tag = 'output window, operand 0, single buffered']
    #allocation3 [shape = 's32[1]{0}', space=sflag, size = 0x4, scoped, tag = 'scoped memory for tpu_custom_call.1']
    %6 = vsyncpa [#allocation3], 0
    // Predicated region
    $region2: #{tpu_custom_call.1} parent=1 // pred_check
      _
    $region3: #{tpu_custom_call.1} parent=1 // pred_check_branch
      %8 = sbr.rel (0) target = $region5
    $region4: #{tpu_custom_call.1} parent=1 // pred_region
      _
    $region5: #{tpu_custom_call.1} parent=1 // pred_fallthru
      _
    %v9 = vld [vmem:[%s0] sm:$0xff]
    %vm10 = vcmask 261120
    %11 = vst.msk [vmem:[#allocation2] sm:$0xff] %vm10, %v9
    // Predicated region
    $region6: #{tpu_custom_call.1} parent=1 // pred_check
      _
    $region7: #{tpu_custom_call.1} parent=1 // pred_check_branch
      %13 = sbr.rel (0) target = $region9
    $region8: #{tpu_custom_call.1} parent=1 // pred_region
      %15 = vsyncadd [#allocation3], 0
      %s17 = sshll.u32 [#allocation2], 4
      %s18 = int_to_ptr.vmem [resolvable:$true] %s17
      %s19 = sshll.u32 %s1, 4
      %s20 = int_to_ptr.hbm [resolvable:$true] %s19
      %22 = dma.vmem_to_hbm [thread:$0]  %s18, 128, %s20, [#allocation3]
    $region9: #{tpu_custom_call.1} parent=1 // pred_fallthru
      _
    // Predicated region
    $region10: #{tpu_custom_call.1} parent=1 // pred_check
      _
    $region11: #{tpu_custom_call.1} parent=1 // pred_check_branch
      %24 = sbr.rel (0) target = $region13
    $region12: #{tpu_custom_call.1} parent=1 // pred_region
      %26 = dma.done [#allocation3], 128
    $region13: #{tpu_custom_call.1} parent=1 // pred_fallthru
      _
    %27 = vsyncpa [#allocation3], 1

</llo_original>
